<compile_context>
chip_gen: v6e
topology: v6e:2x2x1
jax: 0.10.0
libtpu: 0.0.40
codegen_flags: <defaults>
</compile_context>

<pallas_src>
import functools

import jax
import jax.numpy as jnp
from jax.experimental import pallas as pl
from jax.experimental.pallas import tpu as pltpu


def _round_up(x, m):
    return ((x + m - 1) // m) * m


def _pick_tile_n(N, tile_n):
    """Largest multiple-of-8 tile <= tile_n that divides N; else ragged tile_n."""
    if N <= tile_n:
        return N
    for t in range(tile_n, 7, -8):
        if N % t == 0:
            return t
    return tile_n  # ragged last tile; Pallas masks the boundary writeback


def _embed_kernel(patch_ref, w_ref, pos_ref, o_ref):
    # patch_ref: (TN, Kp)  patch pixels (compute dtype, e.g. bf16)
    # w_ref:     (Kp, D)   packed projection weight (compute dtype), grid-resident
    # pos_ref:   (TN, D)   position embedding with conv bias folded in (compute dtype)
    # o_ref:     (TN, D)   output tile
    acc = jnp.dot(patch_ref[...], w_ref[...],
                  preferred_element_type=jnp.float32)          # MXU, f32 accum
    o_ref[...] = (acc + pos_ref[...].astype(jnp.float32)).astype(o_ref.dtype)


def prepare_siglip_embedding_params(conv_weight, conv_bias, pos_embedding,
                                    compute_dtype=jnp.bfloat16):
    """One-time parameter prep (hoisted out of the forward pass).

    conv_weight:   (D, C, P, P)  PyTorch Conv2d layout
    conv_bias:     (D,)
    pos_embedding: (N, D)
    Returns:
      w_packed:      (K_pad, D) weight reshaped to (K, D) with k = (c, ph, pw),
                     zero-padded along K, cast to `compute_dtype`.
      pos_plus_bias: (N, D) position table with the conv bias folded in,
                     stored in `compute_dtype` (upcast to f32 in the kernel).
    """
    D, C, P, _ = conv_weight.shape
    K = C * P * P
    if K % 128 == 0:
        K_pad = K
    elif K <= 128:
        K_pad = _round_up(K, 8)
    else:
        K_pad = _round_up(K, 128)
    w = conv_weight.reshape(D, K).T                      # (K, D)
    if K_pad != K:
        w = jnp.pad(w, ((0, K_pad - K), (0, 0)))         # zero rows: no effect
    w_packed = w.astype(compute_dtype)
    pos_plus_bias = (pos_embedding.astype(jnp.float32)
                     + conv_bias.astype(jnp.float32)[None, :]).astype(compute_dtype)
    return w_packed, pos_plus_bias


@functools.partial(jax.jit, static_argnames=("patch_size", "tile_n", "out_dtype"))
def siglip_vision_embeddings(pixel_values, w_packed, pos_plus_bias, *,
                             patch_size, tile_n=512, out_dtype=None):
    """pixel_values: (B, C, H, W) NCHW.  Returns (B, N, D) in `out_dtype`."""
    B, C, H, W = pixel_values.shape
    P = patch_size
    Gh, Gw = H // P, W // P
    N = Gh * Gw
    K = C * P * P
    K_pad, D = w_packed.shape
    compute_dtype = w_packed.dtype
    if out_dtype is None:
        out_dtype = compute_dtype

    # --- patch extraction (XLA side; cast first so the shuffle is half-width) ---
    # TODO(synk): fuse this NCHW -> (B, N, K) gather into the kernel via
    # memory_space=pl.ANY + manual per-(b, gh) row-slab DMAs so the intermediate
    # never hits HBM.
    x = pixel_values.astype(compute_dtype).reshape(B, C, Gh, P, Gw, P)
    x = jnp.transpose(x, (0, 2, 4, 1, 3, 5))             # (B, Gh, Gw, C, P, P)
    patches = x.reshape(B, N, K)                         # (B, N, K)
    if K_pad != K:
        # Weight pad rows are zero, so the pad value here cannot affect results.
        patches = jnp.pad(patches, ((0, 0), (0, 0), (0, K_pad - K)))

    # --- tiling over the patch dimension -------------------------------------
    assert tile_n % 8 == 0
    TN = _pick_tile_n(N, tile_n)
    num_n_tiles = pl.cdiv(N, TN)
    # Batch is the innermost (fastest-varying) grid axis: the weight block index
    # is constant and the pos block index depends only on n, so both stay
    # resident in VMEM across the whole batch (no re-DMA).
    grid = (num_n_tiles, B)

    in_item = jnp.dtype(compute_dtype).itemsize
    out_item = jnp.dtype(out_dtype).itemsize
    cost = pl.CostEstimate(
        flops=2 * B * N * K_pad * D,
        transcendentals=0,
        bytes_accessed=(B * N * K_pad * in_item     # patches, streamed once
                        + K_pad * D * in_item       # weight, fetched once
                        + N * D * in_item           # pos, resident across batch
                        + B * N * D * out_item))    # output writeback

    # Double-buffered per-step VMEM footprint; kept under the 32 MiB scoped
    # default so it is safe even on v7x's 64 MiB physical VMEM.
    vmem_est = 2 * (TN * K_pad * in_item + TN * D * in_item + TN * D * out_item
                    + K_pad * D * in_item)
    vmem_limit = int(min(32 * 1024 * 1024, max(8 * 1024 * 1024, 2 * vmem_est)))

    out = pl.pallas_call(
        _embed_kernel,
        out_shape=jax.ShapeDtypeStruct((B, N, D), out_dtype),
        grid_spec=pltpu.PrefetchScalarGridSpec(
            num_scalar_prefetch=0,
            grid=grid,
            in_specs=[
                # (TN, K_pad) patch tile of the current batch element
                pl.BlockSpec((pl.Squeezed(), TN, K_pad), lambda n, b: (b, n, 0)),
                # grid-invariant packed weight (fetched once, stays in VMEM)
                pl.BlockSpec((K_pad, D), lambda n, b: (0, 0)),
                # position embedding (+ folded bias) tile; invariant across b
                pl.BlockSpec((TN, D), lambda n, b: (n, 0)),
            ],
            out_specs=pl.BlockSpec((pl.Squeezed(), TN, D),
                                   lambda n, b: (b, n, 0)),
        ),
        compiler_params=pltpu.CompilerParams(
            dimension_semantics=("parallel", "parallel"),
            vmem_limit_bytes=vmem_limit),
        cost_estimate=cost,
    )(patches, w_packed, pos_plus_bias)
    return out


def _reference(pixel_values, conv_weight, conv_bias, pos_embedding, patch_size):
    # Pure-JAX f32 reference: strided conv (NCHW/OIHW) + bias + position embedding.
    conv = jax.lax.conv_general_dilated(
        pixel_values.astype(jnp.float32), conv_weight.astype(jnp.float32),
        window_strides=(patch_size, patch_size), padding="VALID",
        dimension_numbers=("NCHW", "OIHW", "NCHW"),
        precision=jax.lax.Precision.HIGHEST,
        preferred_element_type=jnp.float32)
    conv = conv + conv_bias.reshape(1, -1, 1, 1).astype(jnp.float32)
    B, D, Gh, Gw = conv.shape
    emb = conv.reshape(B, D, Gh * Gw).transpose(0, 2, 1)   # (B, N, D)
    return emb + pos_embedding[None, :, :].astype(jnp.float32)


if __name__ == "__main__":
    key = jax.random.PRNGKey(0)

    # ---- Config A: module-consistent toy shapes ----------------------------
    # num_channels=4, image_size=16, patch_size=4 -> num_patches=16, hidden=32
    B, C, IMG, P, D = 2, 4, 16, 4, 32
    N = (IMG // P) ** 2
    k1, k2, k3, k4, k5 = jax.random.split(key, 5)
    pixel_values = jax.random.normal(k1, (B, C, IMG, IMG), dtype=jnp.float32)
    conv_weight = jax.random.normal(k2, (D, C, P, P), dtype=jnp.float32) * 0.05
    conv_bias = jax.random.normal(k3, (D,), dtype=jnp.float32) * 0.02
    pos_embedding = jax.random.normal(k4, (N, D), dtype=jnp.float32) * 0.02

    ref_f32 = _reference(pixel_values, conv_weight, conv_bias, pos_embedding, P)

    # 1) Layout/exactness check: f32 compute path, tight tolerance.
    w32, pos32 = prepare_siglip_embedding_params(
        conv_weight, conv_bias, pos_embedding, compute_dtype=jnp.float32)
    out32 = jax.block_until_ready(
        siglip_vision_embeddings(pixel_values, w32, pos32, patch_size=P))
    assert out32.shape == (B, N, D)
    assert out32.dtype == jnp.float32
    assert jnp.allclose(out32, ref_f32, atol=2e-3, rtol=2e-3), "f32 path mismatch"

    # 2) Performance path: bf16 MXU operands (f32 accumulation), bf16 output.
    wbf, posbf = prepare_siglip_embedding_params(
        conv_weight, conv_bias, pos_embedding, compute_dtype=jnp.bfloat16)
    outbf = jax.block_until_ready(
        siglip_vision_embeddings(pixel_values, wbf, posbf, patch_size=P))
    assert outbf.shape == (B, N, D)
    assert outbf.dtype == jnp.bfloat16
    assert jnp.allclose(outbf.astype(jnp.float32), ref_f32,
                        atol=3e-2, rtol=3e-2), "bf16 path mismatch"

    # ---- Config B: ragged N-tiling (N % TN != 0) ----------------------------
    # image_size=24, patch_size=4 -> N=36; tile_n=16 forces a partial last tile.
    B2, C2, IMG2, P2, D2 = 2, 3, 24, 4, 32
    N2 = (IMG2 // P2) ** 2
    j1, j2, j3, j4 = jax.random.split(k5, 4)
    px2 = jax.random.normal(j1, (B2, C2, IMG2, IMG2), dtype=jnp.float32)
    cw2 = jax.random.normal(j2, (D2, C2, P2, P2), dtype=jnp.float32) * 0.05
    cb2 = jax.random.normal(j3, (D2,), dtype=jnp.float32) * 0.02
    pe2 = jax.random.normal(j4, (N2, D2), dtype=jnp.float32) * 0.02
    ref2 = _reference(px2, cw2, cb2, pe2, P2)
    wp2, pp2 = prepare_siglip_embedding_params(cw2, cb2, pe2,
                                               compute_dtype=jnp.float32)
    out2 = jax.block_until_ready(
        siglip_vision_embeddings(px2, wp2, pp2, patch_size=P2, tile_n=16))
    assert out2.shape == (B2, N2, D2)
    assert jnp.allclose(out2, ref2, atol=2e-3, rtol=2e-3), "ragged-tile mismatch"

    print("KERNEL_OK")
</pallas_src>

<mosaic_0001>
module attributes {stable_mosaic.version = 11 : i64} {
  func.func @_embed_kernel(%arg0: i32, %arg1: i32, %arg2: memref<1x16x64xf32, #tpu.memory_space<vmem>>, %arg3: memref<64x32xf32, #tpu.memory_space<vmem>>, %arg4: memref<16x32xf32, #tpu.memory_space<vmem>>, %arg5: memref<1x16x32xf32, #tpu.memory_space<vmem>>) attributes {dimension_semantics = [#tpu.dimension_semantics<parallel>, #tpu.dimension_semantics<parallel>], iteration_bounds = array<i64: 1, 2>, scalar_prefetch = 0 : i64, scratch_operands = 0 : i64, tpu.core_type = #tpu.core_type<tc>, window_params = [{transform_indices = @transform_0, window_bounds = array<i64: 1, 16, 64>}, {pipeline_mode = #tpu.pipeline_mode<synchronous>, transform_indices = @transform_1, window_bounds = array<i64: 64, 32>}, {transform_indices = @transform_2, window_bounds = array<i64: 16, 32>}, {transform_indices = @transform_3, window_bounds = array<i64: 1, 16, 32>}]} {
    %c0 = arith.constant 0 : index
    %c0_0 = arith.constant 0 : index
    %c0_1 = arith.constant 0 : index
    %0 = vector.load %arg2[%c0, %c0_0, %c0_1] : memref<1x16x64xf32, #tpu.memory_space<vmem>>, vector<1x16x64xf32>
    %1 = vector.shape_cast %0 : vector<1x16x64xf32> to vector<16x64xf32>
    %c0_2 = arith.constant 0 : index
    %c0_3 = arith.constant 0 : index
    %2 = vector.load %arg3[%c0_2, %c0_3] : memref<64x32xf32, #tpu.memory_space<vmem>>, vector<64x32xf32>
    %cst = arith.constant dense<0.000000e+00> : vector<16x32xf32>
    %3 = tpu.matmul %1, %2, %cst {dimension_numbers = #tpu.dot_dimension_numbers<[1], [0], [0], [1], [0, 0, 1, 1], [], []>} : vector<16x64xf32>, vector<64x32xf32>, vector<16x32xf32> -> vector<16x32xf32>
    %c0_4 = arith.constant 0 : index
    %c0_5 = arith.constant 0 : index
    %4 = vector.load %arg4[%c0_4, %c0_5] : memref<16x32xf32, #tpu.memory_space<vmem>>, vector<16x32xf32>
    %5 = arith.addf %3, %4 : vector<16x32xf32>
    %c0_6 = arith.constant 0 : index
    %c0_7 = arith.constant 0 : index
    %c0_8 = arith.constant 0 : index
    %6 = vector.load %arg5[%c0_6, %c0_7, %c0_8] : memref<1x16x32xf32, #tpu.memory_space<vmem>>, vector<1x16x32xf32>
    %7 = vector.shape_cast %6 : vector<1x16x32xf32> to vector<16x32xf32>
    %8 = vector.shape_cast %5 : vector<16x32xf32> to vector<1x16x32xf32>
    tpu.vector_store %arg5[%c0_6, %c0_7, %c0_8], %8 {strides = array<i32>} : memref<1x16x32xf32, #tpu.memory_space<vmem>>, vector<1x16x32xf32>,
    return
  }
  func.func @transform_0(%arg0: i32, %arg1: i32) -> (i32, i32, i32) {
    %c0_i32 = arith.constant 0 : i32
    %c0_i32_0 = arith.constant 0 : i32
    return %arg1, %arg0, %c0_i32 : i32, i32, i32
  }
  func.func @transform_1(%arg0: i32, %arg1: i32) -> (i32, i32) {
    %c0_i32 = arith.constant 0 : i32
    %c0_i32_0 = arith.constant 0 : i32
    %c0_i32_1 = arith.constant 0 : i32
    return %c0_i32, %c0_i32_0 : i32, i32
  }
  func.func @transform_2(%arg0: i32, %arg1: i32) -> (i32, i32) {
    %c0_i32 = arith.constant 0 : i32
    %c0_i32_0 = arith.constant 0 : i32
    return %arg0, %c0_i32 : i32, i32
  }
  func.func @transform_3(%arg0: i32, %arg1: i32) -> (i32, i32, i32) {
    %c0_i32 = arith.constant 0 : i32
    %c0_i32_0 = arith.constant 0 : i32
    return %arg1, %arg0, %c0_i32 : i32, i32, i32
  }
}

</mosaic_0001>

<llo_original>
// kernel: siglip_vision_embeddings.1
$region0: #{siglip_vision_embeddings.1}
  #allocation0 [shape = 'u32[]', space=smem, size = 0x4, offset = 0x4, fixed_abs, tag = 'smem constant byte address 0x4 - core index']
  #allocation1 [shape = 'u32[144,128]{1,0:T(1,128)}', space=vmem, size = 0x12000, scoped, tag = 'internal scratch']
  %s0 = inlined_call_operand.vmem [shape: f32[2,16,64], index: 0, kind: input, shape index: {}]
  %s1 = inlined_call_operand.vmem [shape: f32[64,32], index: 1, kind: input, shape index: {}]
  %s2 = inlined_call_operand.vmem [shape: f32[16,32], index: 2, kind: input, shape index: {}]
  %s3 = inlined_call_operand.hbm [shape: f32[2,16,32], index: 3, kind: output, shape index: {}]
  %s4 = sld [smem:[#allocation0]]
  $region45: #{siglip_vision_embeddings.1} parent=0
    _
  %s6 = ssub.s32 1, %s4
  %s7 = scalar_select 0, %s6, %s4
  $region1: #{siglip_vision_embeddings.1} parent=0
    #allocation2 [shape = 'u8[16384]{0}', space=vmem, size = 0x4000, scoped, tag = 'output window, operand 0']
    #allocation3 [shape = 's32[2]{0}', space=sflag, size = 0x8, scoped, tag = 'scoped memory for siglip_vision_embeddings.1']
    %8 = vsyncpa [#allocation3], 0
    %s9 = scalar_lea.sflag [#allocation3], 1
    %10 = vsyncpa %s9, 0
    loop: start=0, step=1, limit=4
    $region2: #{siglip_vision_embeddings.1} parent=1 // loop_pre_header
      _
    $region3: #{siglip_vision_embeddings.1} parent=1 // loop_header
      %s12 = sphi 0, %s16
      %p13 = scmp.ge.s32.totalorder %s12, 4
      %s19 = sphi 0, %s31
      %s20 = sphi 0, %s27
      %s21 = sphi 0, %s19
      %s22 = sphi 0, %s20
      %s23 = sphi 0, %s21
      %s24 = sphi 0, %s22
      %s36 = sphi 0, %s38
      %s39 = sphi 0, %s36
      %s40 = sphi 0, %s39
      %s56 = sphi 0, %s40
      %s60 = sphi 0, %s60
      %s62 = sphi 0, %s60
      %s63 = sphi 0, %s62
      %s77 = sphi 0, %s63
      %s83 = sphi 0, %s85
      %s86 = sphi 0, %s83
      %s87 = sphi 0, %s86
      %s103 = sphi 0, %s87
      %s111 = sphi 0, %s113
      %s114 = sphi 0, %s111
      %s115 = sphi 0, %s114
      %s131 = sphi 0, %s115
    $region4: #{siglip_vision_embeddings.1} parent=1 // loop_header_branch
      %15 = sbr.rel (%p13) target = $region8
    $region5: #{siglip_vision_embeddings.1} parent=1 // loop_body
      %s17 = ssub.s32 %s12, 1
      %s18 = ssub.s32 %s12, 2
      %s25 = sadd.s32 1, %s20
      %p26 = scmp.ge.s32.totalorder %s25, 2
      %s27 = scalar_select %p26, 0, %s25
      %s28 = sadd.s32 1, %s19
      %s29 = scalar_select %p26, %s28, %s19
      %p30 = scmp.ge.s32.totalorder %s29, 1
      %s31 = scalar_select %p30, 0, %s29
      %s32 = ssub.s32 %s20, %s27
      %s33 = ssub.s32 %s19, %s31
      %s34 = sor.u32 %s32, %s33
      %p35 = scmp.eq.s32.totalorder %s34, 0
      %s37 = sadd.s32 %s36, 1
      %s38 = scalar_select %p35, %s36, %s37
      %p41 = pneg %p35
      %p42 = scmp.eq.s32.totalorder %s12, 1
      %p43 = por %p41, %p42
      %p44 = scmp.ne.s32.totalorder %s36, %s39
      %p45 = scmp.eq.s32.totalorder %s12, 0
      %p46 = por %p44, %p45
      %p47 = scmp.ne.s32.totalorder %s36, %s39
      %p48 = scmp.eq.s32.totalorder %s17, 1
      %p49 = por %p47, %p48
      %p50 = scmp.ne.s32.totalorder %s39, %s40
      %p51 = scmp.eq.s32.totalorder %s17, 0
      %p52 = por %p50, %p51
      %p53 = scmp.ne.s32.totalorder %s39, %s40
      %p54 = scmp.eq.s32.totalorder %s18, 1
      %p55 = por %p53, %p54
      %p57 = scmp.ne.s32.totalorder %s40, %s56
      %p58 = scmp.eq.s32.totalorder %s18, 0
      %p59 = por %p57, %p58
      %s61 = sadd.s32 %s60, 1
      %p64 = scmp.eq.s32.totalorder %s12, 1
      %p65 = scmp.ne.s32.totalorder %s60, %s62
      %p66 = scmp.eq.s32.totalorder %s12, 0
      %p67 = por %p65, %p66
      %p68 = scmp.ne.s32.totalorder %s60, %s62
      %p69 = scmp.eq.s32.totalorder %s17, 1
      %p70 = por %p68, %p69
      %p71 = scmp.ne.s32.totalorder %s62, %s63
      %p72 = scmp.eq.s32.totalorder %s17, 0
      %p73 = por %p71, %p72
      %p74 = scmp.ne.s32.totalorder %s62, %s63
      %p75 = scmp.eq.s32.totalorder %s18, 1
      %p76 = por %p74, %p75
      %p78 = scmp.ne.s32.totalorder %s63, %s77
      %p79 = scmp.eq.s32.totalorder %s18, 0
      %p80 = por %p78, %p79
      %s81 = ssub.s32 %s19, %s31
      %p82 = scmp.eq.s32.totalorder %s81, 0
      %s84 = sadd.s32 %s83, 1
      %s85 = scalar_select %p82, %s83, %s84
      %p88 = pneg %p82
      %p89 = scmp.eq.s32.totalorder %s12, 1
      %p90 = por %p88, %p89
      %p91 = scmp.ne.s32.totalorder %s83, %s86
      %p92 = scmp.eq.s32.totalorder %s12, 0
      %p93 = por %p91, %p92
      %p94 = scmp.ne.s32.totalorder %s83, %s86
      %p95 = scmp.eq.s32.totalorder %s17, 1
      %p96 = por %p94, %p95
      %p97 = scmp.ne.s32.totalorder %s86, %s87
      %p98 = scmp.eq.s32.totalorder %s17, 0
      %p99 = por %p97, %p98
      %p100 = scmp.ne.s32.totalorder %s86, %s87
      %p101 = scmp.eq.s32.totalorder %s18, 1
      %p102 = por %p100, %p101
      %p104 = scmp.ne.s32.totalorder %s87, %s103
      %p105 = scmp.eq.s32.totalorder %s18, 0
      %p106 = por %p104, %p105
      %s107 = ssub.s32 %s20, %s27
      %s108 = ssub.s32 %s19, %s31
      %s109 = sor.u32 %s107, %s108
      %p110 = scmp.eq.s32.totalorder %s109, 0
      %s112 = sadd.s32 %s111, 1
      %s113 = scalar_select %p110, %s111, %s112
      %p116 = pneg %p110
      %p117 = scmp.eq.s32.totalorder %s12, 1
      %p118 = por %p116, %p117
      %p119 = scmp.ne.s32.totalorder %s111, %s114
      %p120 = scmp.eq.s32.totalorder %s12, 0
      %p121 = por %p119, %p120
      %p122 = scmp.ne.s32.totalorder %s111, %s114
      %p123 = scmp.eq.s32.totalorder %s17, 1
      %p124 = por %p122, %p123
      %p125 = scmp.ne.s32.totalorder %s114, %s115
      %p126 = scmp.eq.s32.totalorder %s17, 0
      %p127 = por %p125, %p126
      %p128 = scmp.ne.s32.totalorder %s114, %s115
      %p129 = scmp.eq.s32.totalorder %s18, 1
      %p130 = por %p128, %p129
      %p132 = scmp.ne.s32.totalorder %s115, %s131
      %p133 = scmp.eq.s32.totalorder %s18, 0
      %p134 = por %p132, %p133
      %p135 = scmp.le.s32.totalorder 1, %s12
      %p136 = scmp.lt.s32.totalorder %s12, 3
      %p137 = pnand %p135, %p136
      %p138 = pneg %p137
      // Predicated region
      $region9: #{siglip_vision_embeddings.1} parent=5 // pred_check
        _
      $region10: #{siglip_vision_embeddings.1} parent=5 // pred_check_branch
        %140 = sbr.rel (%p137) target = $region12
      $region11: #{siglip_vision_embeddings.1} parent=5 // pred_region
        %s141 = ssub.s32 %s12, 1
        // Predicated region
        $region13: #{siglip_vision_embeddings.1} parent=11 // pred_check
          %p142 = pneg %p73
        $region14: #{siglip_vision_embeddings.1} parent=11 // pred_check_branch
          %144 = sbr.rel (%p142) target = $region16
        $region15: #{siglip_vision_embeddings.1} parent=11 // pred_region
          _
        $region16: #{siglip_vision_embeddings.1} parent=11 // pred_fallthru
          _
        // Predicated region
        $region17: #{siglip_vision_embeddings.1} parent=11 // pred_check
          %p145 = pneg %p99
        $region18: #{siglip_vision_embeddings.1} parent=11 // pred_check_branch
          %147 = sbr.rel (%p145) target = $region20
        $region19: #{siglip_vision_embeddings.1} parent=11 // pred_region
          %s148 = smul.u32 2, %s21
          %p149 = scmp.lt.s32.totalorder %s148, 1
          %s150 = scalar_select %p149, %s148, 1
          %s151 = smul.addr %s150, 8
          %s152 = scalar_lea.vmem %s2, %s151
          %s153 = smul.u32 2, %s21
        $region20: #{siglip_vision_embeddings.1} parent=11 // pred_fallthru
          _
      $region12: #{siglip_vision_embeddings.1} parent=5 // pred_fallthru
        _
      %p154 = scmp.lt.s32.totalorder %s12, 2
      // Predicated region
      $region21: #{siglip_vision_embeddings.1} parent=5 // pred_check
        %p155 = pneg %p154
      $region22: #{siglip_vision_embeddings.1} parent=5 // pred_check_branch
        %157 = sbr.rel (%p155) target = $region24
      $region23: #{siglip_vision_embeddings.1} parent=5 // pred_region
        // Predicated region
        $region25: #{siglip_vision_embeddings.1} parent=23 // pred_check
          %p158 = pneg %p46
        $region26: #{siglip_vision_embeddings.1} parent=23 // pred_check_branch
          %160 = sbr.rel (%p158) target = $region28
        $region27: #{siglip_vision_embeddings.1} parent=23 // pred_region
          %s161 = smul.u32 2, %s19
          %p162 = scmp.lt.s32.totalorder %s20, 1
          %s163 = scalar_select %p162, %s20, 1
          %p164 = scmp.lt.s32.totalorder %s161, 1
          %s165 = scalar_select %p164, %s161, 1
          %s166 = smul.addr %s163, 2
          %s167 = sadd.s32 %s165, %s166
          %s168 = smul.addr %s167, 8
          %s169 = scalar_lea.vmem %s0, %s168
          %s170 = smul.u32 2, %s19
        $region28: #{siglip_vision_embeddings.1} parent=23 // pred_fallthru
          _
      $region24: #{siglip_vision_embeddings.1} parent=5 // pred_fallthru
        _
      %p171 = scmp.le.s32.totalorder 1, %s12
      %p172 = scmp.lt.s32.totalorder %s12, 3
      %p173 = pnand %p171, %p172
      %p174 = pneg %p173
      // Predicated region
      $region29: #{siglip_vision_embeddings.1} parent=5 // pred_check
        _
      $region30: #{siglip_vision_embeddings.1} parent=5 // pred_check_branch
        %176 = sbr.rel (%p173) target = $region32
      $region31: #{siglip_vision_embeddings.1} parent=5 // pred_region
        %s177 = ssub.s32 %s12, 1
        %s178 = smul.u32 2, %s21
        %p179 = scmp.lt.s32.totalorder %s22, 1
        %s180 = scalar_select %p179, %s22, 1
        %p181 = scmp.lt.s32.totalorder %s178, 1
        %s182 = scalar_select %p181, %s178, 1
        %s183 = smul.addr %s180, 2
        %s184 = sadd.s32 %s182, %s183
        %s185 = smul.addr %s184, 8
        %s186 = scalar_lea.vmem %s0, %s185
        %p187 = pneg %p52
        %p188 = pneg %p49
        %p189 = pneg %p73
        %p190 = pneg %p70
        %s191 = smul.u32 2, %s21
        %p192 = scmp.lt.s32.totalorder %s191, 1
        %s193 = scalar_select %p192, %s191, 1
        %s194 = smul.addr %s193, 8
        %s195 = scalar_lea.vmem %s2, %s194
        %p196 = pneg %p99
        %p197 = pneg %p96
        %p198 = pneg %p127
        %p199 = pneg %p124
        %s200 = sand.u32 %s114, 1
        %s201 = scalar_lea.sflag [#allocation3], %s200
        %s202 = sand.u32 %s114, 1
        %s203 = smul.addr %s202, 16
        %s204 = scalar_lea.vmem [#allocation2], %s203
        %s205 = smul.u32 2, %s21
        %p206 = scmp.lt.s32.totalorder %s22, 1
        %s207 = scalar_select %p206, %s22, 1
        %p208 = scmp.lt.s32.totalorder %s205, 1
        %s209 = scalar_select %p208, %s205, 1
        %s210 = smul.addr %s207, 2
        %s211 = sadd.s32 %s209, %s210
        %s212 = smul.addr %s211, 8
        %s213 = scalar_lea.vmem %s0, %s212
        %s214 = smul.u32 2, %s21
        %s215 = smul.u32 2, %s21
        %p216 = scmp.lt.s32.totalorder %s215, 1
        %s217 = scalar_select %p216, %s215, 1
        %s218 = smul.addr %s217, 8
        %s219 = scalar_lea.vmem %s2, %s218
        %s220 = smul.u32 2, %s21
        %s221 = smul.u32 2, %s21
        %v222 = vld [vmem:[%s213] sm:$0xff]
        %v223 = vld [vmem:[%s213 + $0x8] sm:$0xff]
        %v224 = vld [vmem:[%s1] sm:$0xff]
        %v225 = vld [vmem:[%s1 + $0x8] sm:$0xff]
        %v226 = vld [vmem:[%s1 + $0x10] sm:$0xff]
        %v227 = vld [vmem:[%s1 + $0x18] sm:$0xff]
        %v228 = vld [vmem:[%s1 + $0x20] sm:$0xff]
        %v229 = vld [vmem:[%s1 + $0x28] sm:$0xff]
        %v230 = vld [vmem:[%s1 + $0x30] sm:$0xff]
        %v231 = vld [vmem:[%s1 + $0x38] sm:$0xff]
        %v232 = vld [vmem:[%s219] sm:$0xff]
        %v233 = vld [vmem:[%s219 + $0x8] sm:$0xff]
        %vm234 = vcmask 523264
        %v236 = vsel %vm234, %v222, 0
        %v239 = vsel %vm234, %v223, 0
        %241 = vmatprep.subr.mxu0 0.0
        %242 = vmatpush1.msra.mxu0 0.0
        %243 = vmatprep.subr.mxu0 0.0
        %244 = vmatpush1.msra.mxu0 0.0
        %245 = vmatprep.subr.mxu0 0.0
        %246 = vmatpush1.msra.mxu0 0.0
        %247 = vmatprep.subr.mxu0 0.0
        %248 = vmatpush1.msra.mxu0 0.0
        %249 = vmatprep.subr.mxu0 0.0
        %250 = vmatpush1.msra.mxu0 0.0
        %251 = vmatprep.subr.mxu0 0.0
        %252 = vmatpush1.msra.mxu0 0.0
        %253 = vmatprep.subr.mxu0 0.0
        %254 = vmatpush1.msra.mxu0 0.0
        %255 = vmatprep.subr.mxu0 0.0
        %256 = vmatpush1.msra.mxu0 0.0
        %257 = vmatprep.subr.mxu0 0.0
        %258 = vmatpush1.msra.mxu0 %v231
        %259 = vmatprep.subr.mxu0 0.0
        %260 = vmatpush1.msra.mxu0 %v230
        %261 = vmatprep.subr.mxu0 0.0
        %262 = vmatpush1.msra.mxu0 %v229
        %263 = vmatprep.subr.mxu0 0.0
        %264 = vmatpush1.msra.mxu0 %v228
        %265 = vmatprep.subr.mxu0 0.0
        %266 = vmatpush1.msra.mxu0 %v227
        %267 = vmatprep.subr.mxu0 0.0
        %268 = vmatpush1.msra.mxu0 %v226
        %269 = vmatprep.subr.mxu0 0.0
        %270 = vmatpush1.msra.mxu0 %v225
        %271 = vmatprep.subr.mxu0 0.0
        %272 = vmatpush1.msra.mxu0 %v224
        %273 = vmatprep.subr.mxu0 0.0
        %274 = vmatpush2.msra.mxu0 0.0
        %275 = vmatprep.subr.mxu0 0.0
        %276 = vmatpush2.msra.mxu0 0.0
        %277 = vmatprep.subr.mxu0 0.0
        %278 = vmatpush2.msra.mxu0 0.0
        %279 = vmatprep.subr.mxu0 0.0
        %280 = vmatpush2.msra.mxu0 0.0
        %281 = vmatprep.subr.mxu0 0.0
        %282 = vmatpush2.msra.mxu0 0.0
        %283 = vmatprep.subr.mxu0 0.0
        %284 = vmatpush2.msra.mxu0 0.0
        %285 = vmatprep.subr.mxu0 0.0
        %286 = vmatpush2.msra.mxu0 0.0
        %287 = vmatprep.subr.mxu0 0.0
        %288 = vmatpush2.msra.mxu0 0.0
        %289 = vmatprep.subr.mxu0 0.0
        %290 = vmatpush2.msra.mxu0 0.0
        %291 = vmatprep.subr.mxu0 0.0
        %292 = vmatpush2.msra.mxu0 0.0
        %293 = vmatprep.subr.mxu0 0.0
        %294 = vmatpush2.msra.mxu0 0.0
        %295 = vmatprep.subr.mxu0 0.0
        %296 = vmatpush2.msra.mxu0 0.0
        %297 = vmatprep.subr.mxu0 0.0
        %298 = vmatpush2.msra.mxu0 0.0
        %299 = vmatprep.subr.mxu0 0.0
        %300 = vmatpush2.msra.mxu0 0.0
        %301 = vmatprep.subr.mxu0 0.0
        %302 = vmatpush2.msra.mxu0 0.0
        %303 = vmatprep.subr.mxu0 0.0
        %304 = vmatpush2.msra.mxu0 0.0
        %305 = vmatprep.mubr.f32.mxu0 0.0
        %306 = vmatmul.mubr.f32.gmra.mxu0 %v236
        %v307 = vpop.f32.mrf.mxu0
        %v308 = vadd.f32 %v232, %v307
        %v309 = vpop.f32.mrf.mxu0
        %310 = vmatprep.mubr.f32.mxu0 0.0
        %311 = vmatmul.mubr.f32.gmra.mxu0 %v239
        %v312 = vpop.f32.mrf.mxu0
        %v313 = vadd.f32 %v233, %v312
        %v314 = vpop.f32.mrf.mxu0
        %315 = vdwg.mxu0
        %vm316 = vcmask 261120
        %317 = vst.msk [vmem:[%s204] sm:$0xff] %vm316, %v308
        %318 = vst.msk [vmem:[%s204 + $0x8] sm:$0xff] %vm316, %v313
        %s319 = sand.u32 %s114, 1
        %s320 = scalar_lea.sflag [#allocation3], %s319
        %s321 = sand.u32 %s114, 1
        %s322 = smul.addr %s321, 16
        %s323 = scalar_lea.vmem [#allocation2], %s322
        // Predicated region
        $region33: #{siglip_vision_embeddings.1} parent=31 // pred_check
          %p324 = pneg %p124
        $region34: #{siglip_vision_embeddings.1} parent=31 // pred_check_branch
          %326 = sbr.rel (%p324) target = $region36
        $region35: #{siglip_vision_embeddings.1} parent=31 // pred_region
          %s327 = smul.u32 2, %s21
          %s329 = ssub.s32 256, 256
          %330 = vsyncadd %s320, %s329
          %s331 = smul.addr %s22, 2
          %s332 = sadd.s32 %s327, %s331
          %s333 = smul.addr %s332, 128
          %s334 = scalar_lea.hbm %s3, %s333
          %s335 = sshll.u32 %s323, 4
          %s336 = int_to_ptr.vmem [resolvable:$true] %s335
          %341 = dma.vmem_to_hbm [thread:$0]  %s336, 256, %s334, %s320, 128, 128, 8
        $region36: #{siglip_vision_embeddings.1} parent=31 // pred_fallthru
          _
      $region32: #{siglip_vision_embeddings.1} parent=5 // pred_fallthru
        _
      %p342 = scmp.le.s32.totalorder 2, %s12
      // Predicated region
      $region37: #{siglip_vision_embeddings.1} parent=5 // pred_check
        %p343 = pneg %p342
      $region38: #{siglip_vision_embeddings.1} parent=5 // pred_check_branch
        %345 = sbr.rel (%p343) target = $region40
      $region39: #{siglip_vision_embeddings.1} parent=5 // pred_region
        %s346 = ssub.s32 %s12, 2
        // Predicated region
        $region41: #{siglip_vision_embeddings.1} parent=39 // pred_check
          %p347 = pneg %p130
        $region42: #{siglip_vision_embeddings.1} parent=39 // pred_check_branch
          %349 = sbr.rel (%p347) target = $region44
        $region43: #{siglip_vision_embeddings.1} parent=39 // pred_region
          %s350 = sand.u32 %s115, 1
          %s351 = scalar_lea.sflag [#allocation3], %s350
          %s352 = sand.u32 %s115, 1
          %s353 = smul.addr %s352, 16
          %s354 = scalar_lea.vmem [#allocation2], %s353
          %355 = dma.done %s351, 256
        $region44: #{siglip_vision_embeddings.1} parent=39 // pred_fallthru
          _
      $region40: #{siglip_vision_embeddings.1} parent=5 // pred_fallthru
        _
    $region6: #{siglip_vision_embeddings.1} parent=1 // loop_footer
      %s16 = sadd.s32 1, %s12
    $region7: #{siglip_vision_embeddings.1} parent=1 // loop_footer_branch
      %11 = sbr.rel target = $region3
    $region8: #{siglip_vision_embeddings.1} parent=1 // loop_exit
      _
    %356 = vsyncpa [#allocation3], 1
    %s357 = scalar_lea.sflag [#allocation3], 1
    %358 = vsyncpa %s357, 1

</llo_original>
